<compile_context>
chip_gen: v7x
topology: tpu7x:2x2x1
jax: 0.10.0
libtpu: 0.0.40
codegen_flags: <defaults>
</compile_context>

<pallas_src>
import numpy as np
import jax
import jax.numpy as jnp
from jax.experimental import pallas as pl
from jax.experimental.pallas import tpu as pltpu


def _scale_kernel(var_param_ref, scale_ref):
    # scale = sqrt(softplus(var_param)); softplus via numerically stable
    # logaddexp(x, 0) = log(1 + e^x).  Operates on the tiny (1, var_size) row
    # (var_size is 1 for 'spherical', action_size for 'diagonal').
    vp = var_param_ref[...]                       # already float32 (see wrapper)
    scale_ref[...] = jnp.sqrt(jnp.logaddexp(vp, 0.0))


def gaussian_head_forward(mean, var_param):
    """Forward of GaussianHeadWithStateIndependentCovariance.

    Args:
      mean:      (batch, action_size) -- mean produced by the policy network.
      var_param: (1,) for 'spherical' or (action_size,) for 'diagonal'.

    Returns:
      (loc, scale) defining Independent(Normal(loc, scale), 1):
        loc   = mean (identity, no copy)
        scale = sqrt(softplus(var_param)) as a (1, var_size) float32 row;
                it broadcasts against `mean` exactly like the torch Normal.
                NOTE: scale is float32 even if mean is lower precision (this
                matches the PyTorch module, whose var_param is float32).
    """
    # Present the (possibly scalar) var parameter as a 2-D f32 row.  This is a
    # reshape/cast only (no broadcast_to, no materialized (1, A) buffer).
    vp_row = var_param.reshape(1, -1).astype(jnp.float32)
    var_size = vp_row.shape[1]

    scale = pl.pallas_call(
        _scale_kernel,
        out_shape=jax.ShapeDtypeStruct((1, var_size), jnp.float32),
        in_specs=[pl.BlockSpec(memory_space=pltpu.MemorySpace.VMEM)],
        out_specs=pl.BlockSpec(memory_space=pltpu.MemorySpace.VMEM),
    )(vp_row)

    # loc is a pure pass-through of the network-produced mean; returning it
    # directly avoids a full (batch, action_size) HBM read + write.
    loc = mean
    return loc, scale


if __name__ == "__main__":
    key = jax.random.PRNGKey(0)

    batch = 2
    action_size = 8

    # "mean" would come from an upstream policy network; synthesize it.
    mean = jax.random.normal(key, (batch, action_size), dtype=jnp.float32)

    # Module default: var_type='spherical', var_param_init=0 -> one scalar.
    var_param = jnp.zeros((1,), dtype=jnp.float32)

    loc, scale = gaussian_head_forward(mean, var_param)
    loc = jax.block_until_ready(loc)
    scale = jax.block_until_ready(scale)

    # Reference check in plain JAX.
    ref_scale = jnp.sqrt(jax.nn.softplus(var_param)).reshape(1, -1)
    np.testing.assert_allclose(np.asarray(loc), np.asarray(mean), rtol=1e-6, atol=1e-6)
    np.testing.assert_allclose(np.asarray(scale), np.asarray(ref_scale),
                               rtol=1e-6, atol=1e-6)
    # scale broadcasts against mean exactly as torch Normal(loc, scale) would.
    assert jnp.broadcast_shapes(scale.shape, mean.shape) == mean.shape

    # Also exercise the 'diagonal' parameterization path.
    var_param_diag = 0.1 * jax.random.normal(
        jax.random.PRNGKey(1), (action_size,), dtype=jnp.float32
    )
    _, scale_diag = gaussian_head_forward(mean, var_param_diag)
    scale_diag = jax.block_until_ready(scale_diag)
    ref_diag = jnp.sqrt(jax.nn.softplus(var_param_diag)).reshape(1, -1)
    np.testing.assert_allclose(np.asarray(scale_diag), np.asarray(ref_diag),
                               rtol=1e-6, atol=1e-6)
    assert jnp.broadcast_shapes(scale_diag.shape, mean.shape) == mean.shape

    print("KERNEL_OK")
</pallas_src>

<mosaic_0001>
module attributes {stable_mosaic.version = 11 : i64} {
  func.func @_scale_kernel(%arg0: memref<1x1xf32, #tpu.memory_space<vmem>>, %arg1: memref<1x1xf32, #tpu.memory_space<vmem>>) attributes {dimension_semantics = [], scalar_prefetch = 0 : i64, scratch_operands = 0 : i64, tpu.core_type = #tpu.core_type<tc>} {
    %c0 = arith.constant 0 : index
    %c0_0 = arith.constant 0 : index
    %0 = vector.load %arg0[%c0, %c0_0] : memref<1x1xf32, #tpu.memory_space<vmem>>, vector<1x1xf32>
    %cst = arith.constant 0.000000e+00 : f32
    %1 = vector.broadcast %cst : f32 to vector<1x1xf32>
    %2 = arith.maximumf %0, %1 : vector<1x1xf32>
    %3 = vector.broadcast %cst : f32 to vector<1x1xf32>
    %4 = arith.subf %0, %3 : vector<1x1xf32>
    %5 = arith.cmpf one, %4, %4 : vector<1x1xf32>
    %6 = vector.broadcast %cst : f32 to vector<1x1xf32>
    %7 = arith.addf %0, %6 : vector<1x1xf32>
    %8 = math.absf %4 : vector<1x1xf32>
    %cst_1 = arith.constant 0.000000e+00 : f32
    %9 = vector.broadcast %cst_1 : f32 to vector<1x1xf32>
    %10 = arith.subf %9, %8 : vector<1x1xf32>
    %11 = math.exp %10 : vector<1x1xf32>
    %12 = math.log1p %11 : vector<1x1xf32>
    %13 = arith.addf %2, %12 : vector<1x1xf32>
    %14 = arith.select %5, %7, %13 : vector<1x1xi1>, vector<1x1xf32>
    %15 = math.sqrt %14 : vector<1x1xf32>
    %c0_2 = arith.constant 0 : index
    %c0_3 = arith.constant 0 : index
    %16 = vector.load %arg1[%c0_2, %c0_3] : memref<1x1xf32, #tpu.memory_space<vmem>>, vector<1x1xf32>
    tpu.vector_store %arg1[%c0_2, %c0_3], %15 {strides = array<i32>} : memref<1x1xf32, #tpu.memory_space<vmem>>, vector<1x1xf32>,
    return
  }
}

</mosaic_0001>

<llo_original>
// kernel: tpu_custom_call.1
$region0: #{tpu_custom_call.1}
  #allocation0 [shape = 'u32[]', space=smem, size = 0x4, offset = 0x4, fixed_abs, tag = 'smem constant byte address 0x4 - core index']
  #allocation1 [shape = 'u32[144,128]{1,0:T(1,128)}', space=vmem, size = 0x12000, scoped, tag = 'internal scratch']
  #allocation2 [shape = 'f32[1,1]{1,0:T(1,128)S(1)}', space=vmem, size = 0x200, scoped, tag = 'scoped memory for tpu_custom_call.1']
  %s0 = inlined_call_operand.<no memory space> [shape: f32[1,1], index: 0, kind: input, shape index: {}]
  %s1 = inlined_call_operand.hbm [shape: f32[1,1], index: 1, kind: output, shape index: {}]
  %s2 = sld [smem:[#allocation0]]
  $region14: #{tpu_custom_call.1} parent=0
    _
  %s4 = ssub.s32 1, %s2
  %s5 = scalar_select 0, %s4, %s2
  %v6 = vstv %s0
  %7 = vst [vmem:[#allocation2] sm:$0x1] %v6
  $region1: #{tpu_custom_call.1} parent=0
    #allocation3 [shape = 'u8[512]{0}', space=vmem, size = 0x400, scoped, tag = 'output window, operand 0, single buffered']
    #allocation4 [shape = 's32[1]{0}', space=sflag, size = 0x4, scoped, tag = 'scoped memory for tpu_custom_call.1']
    %8 = vsyncpa [#allocation4], 0
    // Predicated region
    $region2: #{tpu_custom_call.1} parent=1 // pred_check
      _
    $region3: #{tpu_custom_call.1} parent=1 // pred_check_branch
      %10 = sbr.rel (0) target = $region5
    $region4: #{tpu_custom_call.1} parent=1 // pred_region
      _
    $region5: #{tpu_custom_call.1} parent=1 // pred_fallthru
      _
    %v11 = vld [vmem:[#allocation2] sm:$0x1]
    %v12 = vmax.f32 %v11, 0.0
    %vm13 = vcmp.ne.f32.partialorder %v11, %v11
    %v14 = vadd.f32 %v11, 0.0
    %v15 = vand.u32 2147483647, %v11
    %v16 = vsub.f32 0.0, %v15
    %v17 = vmul.f32 %v16, 1.442695
    %v18 = vpow.pop %v17
    %v19 = vadd.f32 %v18, 1.0
    %v20 = vlog2.pop %v19
    %v21 = vmul.f32 %v20, 0.6931472
    %v22 = vmul.f32 -0.5, %v18
    %v23 = vadd.f32 %v22, 1.0
    %v24 = vmul.f32 %v23, %v18
    %v25 = vand.u32 2147483647, %v18
    %vm26 = vcmp.lt.f32.partialorder %v25, 0.0004427343
    %v27 = vsel %vm26, %v24, %v21
    %v28 = vadd.f32 %v12, %v27
    %v29 = vsel %vm13, %v14, %v28
    %v30 = vrsqrt.pop %v29
    %v31 = vmul.f32 %v29, %v30
    %vm32 = vcmp.eq.f32.partialorder %v29, inf
    %v33 = vsel %vm32, %v29, %v31
    %vm34 = vcmp.eq.f32.partialorder %v29, 0.0
    %v35 = vand.u32 %v29, 2147483648
    %v36 = vsel %vm34, %v35, %v33
    %vm37 = vcmask 0
    %38 = vst.msk [vmem:[#allocation3] sm:$0x1] %vm37, %v36
    // Predicated region
    $region6: #{tpu_custom_call.1} parent=1 // pred_check
      _
    $region7: #{tpu_custom_call.1} parent=1 // pred_check_branch
      %40 = sbr.rel (0) target = $region9
    $region8: #{tpu_custom_call.1} parent=1 // pred_region
      %s42 = ssub.s32 16, 16
      %43 = vsyncadd [#allocation4], %s42
      %s45 = sshll.u32 [#allocation3], 4
      %s46 = int_to_ptr.vmem [resolvable:$true] %s45
      %48 = dma.vmem_to_hbm [thread:$0]  %s46, 16, %s1, [#allocation4]
    $region9: #{tpu_custom_call.1} parent=1 // pred_fallthru
      _
    // Predicated region
    $region10: #{tpu_custom_call.1} parent=1 // pred_check
      _
    $region11: #{tpu_custom_call.1} parent=1 // pred_check_branch
      %50 = sbr.rel (0) target = $region13
    $region12: #{tpu_custom_call.1} parent=1 // pred_region
      %51 = dma.done [#allocation4], 16
    $region13: #{tpu_custom_call.1} parent=1 // pred_fallthru
      _
    %52 = vsyncpa [#allocation4], 1

</llo_original>
